<compile_context>
chip_gen: v7x
topology: tpu7x:2x2x1
jax: 0.10.0
libtpu: 0.0.40
codegen_flags: <defaults>
</compile_context>

<pallas_src>
import functools

import jax
import jax.numpy as jnp
from jax.experimental import pallas as pl
from jax.experimental.pallas import tpu as pltpu


def _round_up(x: int, m: int) -> int:
    return ((x + m - 1) // m) * m


def _critic_kernel(obs_ref, w_pred_ref, b_pred_ref,
                   w_up_ref, b_up_ref,
                   w_out_ref, b_out_ref,
                   out_ref, up_ref):
    j = pl.program_id(1)

    # --- per-B-tile head: sigmoid(Linear(concat(h,kc))->1) + fc1_up + ReLU ---
    # Only recomputed when the Q-tile index wraps to 0 (new B tile); the result
    # persists in VMEM scratch across the inner Q-tile loop.
    @pl.when(j == 0)
    def _():
        obs = obs_ref[...]                                            # [Bt, Fp] f32
        # elementwise mul + lane reduction (VPU/XLU) instead of a width-1 matmul
        s = jnp.sum(obs * w_pred_ref[...], axis=-1, keepdims=True)    # [Bt, 1]
        value = jax.nn.sigmoid(s + b_pred_ref[0, 0])                  # [Bt, 1]
        up = value * w_up_ref[...] + b_up_ref[...]                    # [Bt, U]
        up = jnp.maximum(up, jnp.float32(0.0))
        up_ref[...] = up.astype(up_ref.dtype)                         # bf16 scratch

    # --- output: Linear(U -> Q), streamed Q tile ------------------------------
    logits = jnp.dot(up_ref[...], w_out_ref[...],
                     preferred_element_type=jnp.float32)              # [Bt, Qt]
    out_ref[...] = (logits + b_out_ref[...]).astype(out_ref.dtype)


def discrete_sac_value_critic_dkt(obs, params, *, block_b: int = 128,
                                  block_q: int = 512):
    """obs: [B, H+K] f32. Returns action_logits [B, Q] f32."""
    w_pred, b_pred, w_up, b_up, w_out, b_out = params
    B, F = obs.shape
    U, Q = w_out.shape

    # ---- tile sizes (lane-dense, 128-aligned Q; sublane-aligned B) ----------
    Fp = _round_up(F, 128)
    Bt = min(_round_up(B, 8), _round_up(block_b, 8))
    Bp = _round_up(B, Bt)
    Qt = min(_round_up(Q, 128), _round_up(block_q, 128))
    Qp = _round_up(Q, Qt)

    # ---- pad inputs / weights in the wrapper (cropped after the call) -------
    obs_p = jnp.zeros((Bp, Fp), jnp.float32).at[:B, :F].set(obs.astype(jnp.float32))
    w_pred_p = jnp.zeros((1, Fp), jnp.float32).at[:, :F].set(w_pred.astype(jnp.float32))
    b_pred_p = b_pred.reshape(1, 1).astype(jnp.float32)
    w_up_p = w_up.reshape(1, U).astype(jnp.float32)
    b_up_p = b_up.reshape(1, U).astype(jnp.float32)
    # bf16 weight stream for the dominant [U, Q] matrix (f32 MXU accumulation)
    w_out_p = jnp.zeros((U, Qp), jnp.bfloat16).at[:, :Q].set(w_out.astype(jnp.bfloat16))
    b_out_p = jnp.zeros((1, Qp), jnp.float32).at[:, :Q].set(b_out.reshape(1, Q).astype(jnp.float32))

    grid = (Bp // Bt, Qp // Qt)

    out = pl.pallas_call(
        _critic_kernel,
        out_shape=jax.ShapeDtypeStruct((Bp, Qp), jnp.float32),
        grid=grid,
        in_specs=[
            pl.BlockSpec((Bt, Fp), lambda i, j: (i, 0)),      # obs     (per B tile)
            pl.BlockSpec((1, Fp), lambda i, j: (0, 0)),       # w_pred  (resident)
            pl.BlockSpec(memory_space=pltpu.MemorySpace.SMEM),  # b_pred scalar
            pl.BlockSpec((1, U), lambda i, j: (0, 0)),        # w_up    (resident)
            pl.BlockSpec((1, U), lambda i, j: (0, 0)),        # b_up    (resident)
            pl.BlockSpec((U, Qt), lambda i, j: (0, j)),       # w_out   (per Q tile)
            pl.BlockSpec((1, Qt), lambda i, j: (0, j)),       # b_out   (per Q tile)
        ],
        out_specs=pl.BlockSpec((Bt, Qt), lambda i, j: (i, j)),
        scratch_shapes=[pltpu.VMEM((Bt, U), jnp.bfloat16)],   # per-B-tile `up`
        compiler_params=pltpu.CompilerParams(
            dimension_semantics=("parallel", "arbitrary")),
    )(obs_p, w_pred_p, b_pred_p, w_up_p, b_up_p, w_out_p, b_out_p)

    return out[:B, :Q]


def make_params(key, obs_dim, up_projection_size, num_questions):
    """Deterministic synthetic parameters (no checkpoint load)."""
    k = jax.random.split(key, 6)
    w_pred = jax.random.normal(k[0], (1, obs_dim), jnp.float32) * 0.05
    b_pred = jax.random.normal(k[1], (1, 1), jnp.float32) * 0.05
    w_up = jax.random.normal(k[2], (1, up_projection_size), jnp.float32) * 0.05
    b_up = jax.random.normal(k[3], (1, up_projection_size), jnp.float32) * 0.05
    w_out = jax.random.normal(k[4], (up_projection_size, num_questions),
                              jnp.float32) * 0.05
    b_out = jax.random.normal(k[5], (1, num_questions), jnp.float32) * 0.05
    return (w_pred, b_pred, w_up, b_up, w_out, b_out)


def reference(obs, params):
    """Pure-JAX reference (matches kernel's bf16 weight stream for the big dot)."""
    w_pred, b_pred, w_up, b_up, w_out, b_out = params
    value = jax.nn.sigmoid(obs @ w_pred.T + b_pred)                  # [B, 1]
    up = jax.nn.relu(value * w_up + b_up)                            # [B, U]
    logits = jnp.dot(up.astype(jnp.bfloat16), w_out.astype(jnp.bfloat16),
                     preferred_element_type=jnp.float32)             # [B, Q]
    return logits + b_out


if __name__ == "__main__":
    # Small shapes consistent with the module's forward:
    #   student_hidden_size -> 32, kc emb dim -> 32 (obs = [B, 64]),
    #   up_projection_size -> 128, num_questions -> 256.
    # (Real model: H=300, U=1200, Q=7652 — same kernel, bigger grid.)
    B = 8
    H = 32            # student_hidden_size
    K = 32            # kc embedding dim
    U = 128           # up_projection_size
    Q = 256           # num_questions

    key = jax.random.PRNGKey(0)
    k_obs, k_par = jax.random.split(key)
    obs = jax.random.normal(k_obs, (B, H + K), jnp.float32)
    params = make_params(k_par, H + K, U, Q)

    # block_q=128 -> grid (1, 2): exercises Q tiling + per-B-tile scratch reuse.
    logits = discrete_sac_value_critic_dkt(obs, params, block_b=128, block_q=128)
    logits = jax.block_until_ready(logits)

    ref = reference(obs, params)
    assert logits.shape == (B, Q)
    assert jnp.allclose(logits, ref, atol=1e-2, rtol=1e-2), "mismatch vs reference"

    print("KERNEL_OK")
</pallas_src>

<mosaic_0001>
module attributes {stable_mosaic.version = 11 : i64} {
  func.func @_critic_kernel(%arg0: i32, %arg1: i32, %arg2: memref<8x128xf32, #tpu.memory_space<vmem>>, %arg3: memref<1x128xf32, #tpu.memory_space<vmem>>, %arg4: memref<1x1xf32, #tpu.memory_space<smem>>, %arg5: memref<1x128xf32, #tpu.memory_space<vmem>>, %arg6: memref<1x128xf32, #tpu.memory_space<vmem>>, %arg7: memref<128x128xbf16, #tpu.memory_space<vmem>>, %arg8: memref<1x128xf32, #tpu.memory_space<vmem>>, %arg9: memref<8x128xf32, #tpu.memory_space<vmem>>, %arg10: memref<8x128xbf16, #tpu.memory_space<vmem>>) attributes {dimension_semantics = [#tpu.dimension_semantics<parallel>, #tpu.dimension_semantics<arbitrary>], iteration_bounds = array<i64: 1, 2>, scalar_prefetch = 0 : i64, scratch_operands = 1 : i64, tpu.core_type = #tpu.core_type<tc>, window_params = [{transform_indices = @transform_0, window_bounds = array<i64: 8, 128>}, {pipeline_mode = #tpu.pipeline_mode<synchronous>, transform_indices = @transform_1, window_bounds = array<i64: 1, 128>}, {transform_indices = @transform_2, window_bounds = array<i64: 1, 1>}, {pipeline_mode = #tpu.pipeline_mode<synchronous>, transform_indices = @transform_3, window_bounds = array<i64: 1, 128>}, {pipeline_mode = #tpu.pipeline_mode<synchronous>, transform_indices = @transform_4, window_bounds = array<i64: 1, 128>}, {transform_indices = @transform_5, window_bounds = array<i64: 128, 128>}, {transform_indices = @transform_6, window_bounds = array<i64: 1, 128>}, {transform_indices = @transform_7, window_bounds = array<i64: 8, 128>}]} {
    %c0_i32 = arith.constant 0 : i32
    %0 = arith.cmpi eq, %arg1, %c0_i32 : i32
    %1 = arith.extui %0 : i1 to i32
    %c0_i32_0 = arith.constant 0 : i32
    %2 = arith.cmpi ne, %1, %c0_i32_0 : i32
    scf.if %2 {
      %c0_8 = arith.constant 0 : index
      %c0_9 = arith.constant 0 : index
      %10 = vector.load %arg2[%c0_8, %c0_9] : memref<8x128xf32, #tpu.memory_space<vmem>>, vector<8x128xf32>
      %c0_10 = arith.constant 0 : index
      %c0_11 = arith.constant 0 : index
      %11 = vector.load %arg3[%c0_10, %c0_11] : memref<1x128xf32, #tpu.memory_space<vmem>>, vector<1x128xf32>
      %12 = vector.broadcast %11 : vector<1x128xf32> to vector<8x128xf32>
      %13 = arith.mulf %10, %12 : vector<8x128xf32>
      %cst_12 = arith.constant dense<0.000000e+00> : vector<8xf32>
      %14 = vector.multi_reduction <add>, %13, %cst_12 [1] : vector<8x128xf32> to vector<8xf32>
      %15 = vector.shape_cast %14 : vector<8xf32> to vector<8x1xf32>
      %c0_13 = arith.constant 0 : index
      %c0_14 = arith.constant 0 : index
      %16 = memref.load %arg4[%c0_13, %c0_14] : memref<1x1xf32, #tpu.memory_space<smem>>
      %17 = vector.broadcast %16 : f32 to vector<8x1xf32>
      %18 = arith.addf %15, %17 : vector<8x1xf32>
      %19 = arith.negf %18 : vector<8x1xf32>
      %20 = math.exp %19 : vector<8x1xf32>
      %cst_15 = arith.constant 1.000000e+00 : f32
      %21 = vector.broadcast %cst_15 : f32 to vector<8x1xf32>
      %22 = arith.addf %21, %20 : vector<8x1xf32>
      %23 = arith.divf %21, %22 : vector<8x1xf32>
      %c0_16 = arith.constant 0 : index
      %c0_17 = arith.constant 0 : index
      %24 = vector.load %arg5[%c0_16, %c0_17] : memref<1x128xf32, #tpu.memory_space<vmem>>, vector<1x128xf32>
      %25 = vector.broadcast %23 : vector<8x1xf32> to vector<8x128xf32>
      %26 = vector.broadcast %24 : vector<1x128xf32> to vector<8x128xf32>
      %27 = arith.mulf %25, %26 : vector<8x128xf32>
      %c0_18 = arith.constant 0 : index
      %c0_19 = arith.constant 0 : index
      %28 = vector.load %arg6[%c0_18, %c0_19] : memref<1x128xf32, #tpu.memory_space<vmem>>, vector<1x128xf32>
      %29 = vector.broadcast %28 : vector<1x128xf32> to vector<8x128xf32>
      %30 = arith.addf %27, %29 : vector<8x128xf32>
      %cst_20 = arith.constant 0.000000e+00 : f32
      %31 = vector.broadcast %cst_20 : f32 to vector<8x128xf32>
      %32 = arith.maximumf %30, %31 : vector<8x128xf32>
      %33 = arith.truncf %32 : vector<8x128xf32> to vector<8x128xbf16>
      %c0_21 = arith.constant 0 : index
      %c0_22 = arith.constant 0 : index
      %34 = vector.load %arg10[%c0_21, %c0_22] : memref<8x128xbf16, #tpu.memory_space<vmem>>, vector<8x128xbf16>
      tpu.vector_store %arg10[%c0_21, %c0_22], %33 {strides = array<i32>} : memref<8x128xbf16, #tpu.memory_space<vmem>>, vector<8x128xbf16>,
    } else {
    }
    %c0 = arith.constant 0 : index
    %c0_1 = arith.constant 0 : index
    %3 = vector.load %arg10[%c0, %c0_1] : memref<8x128xbf16, #tpu.memory_space<vmem>>, vector<8x128xbf16>
    %c0_2 = arith.constant 0 : index
    %c0_3 = arith.constant 0 : index
    %4 = vector.load %arg7[%c0_2, %c0_3] : memref<128x128xbf16, #tpu.memory_space<vmem>>, vector<128x128xbf16>
    %cst = arith.constant dense<0.000000e+00> : vector<8x128xf32>
    %5 = tpu.matmul %3, %4, %cst {dimension_numbers = #tpu.dot_dimension_numbers<[1], [0], [0], [1], [0, 0, 1, 1], [], []>} : vector<8x128xbf16>, vector<128x128xbf16>, vector<8x128xf32> -> vector<8x128xf32>
    %c0_4 = arith.constant 0 : index
    %c0_5 = arith.constant 0 : index
    %6 = vector.load %arg8[%c0_4, %c0_5] : memref<1x128xf32, #tpu.memory_space<vmem>>, vector<1x128xf32>
    %7 = vector.broadcast %6 : vector<1x128xf32> to vector<8x128xf32>
    %8 = arith.addf %5, %7 : vector<8x128xf32>
    %c0_6 = arith.constant 0 : index
    %c0_7 = arith.constant 0 : index
    %9 = vector.load %arg9[%c0_6, %c0_7] : memref<8x128xf32, #tpu.memory_space<vmem>>, vector<8x128xf32>
    tpu.vector_store %arg9[%c0_6, %c0_7], %8 {strides = array<i32>} : memref<8x128xf32, #tpu.memory_space<vmem>>, vector<8x128xf32>,
    return
  }
  func.func @transform_0(%arg0: i32, %arg1: i32) -> (i32, i32) {
    %c0_i32 = arith.constant 0 : i32
    %c0_i32_0 = arith.constant 0 : i32
    return %arg0, %c0_i32 : i32, i32
  }
  func.func @transform_1(%arg0: i32, %arg1: i32) -> (i32, i32) {
    %c0_i32 = arith.constant 0 : i32
    %c0_i32_0 = arith.constant 0 : i32
    %c0_i32_1 = arith.constant 0 : i32
    return %c0_i32, %c0_i32_0 : i32, i32
  }
  func.func @transform_2(%arg0: i32, %arg1: i32) -> (i32, i32) {
    %c0_i32 = arith.constant 0 : i32
    %c0_i32_0 = arith.constant 0 : i32
    %c0_i32_1 = arith.constant 0 : i32
    return %c0_i32, %c0_i32_0 : i32, i32
  }
  func.func @transform_3(%arg0: i32, %arg1: i32) -> (i32, i32) {
    %c0_i32 = arith.constant 0 : i32
    %c0_i32_0 = arith.constant 0 : i32
    %c0_i32_1 = arith.constant 0 : i32
    return %c0_i32, %c0_i32_0 : i32, i32
  }
  func.func @transform_4(%arg0: i32, %arg1: i32) -> (i32, i32) {
    %c0_i32 = arith.constant 0 : i32
    %c0_i32_0 = arith.constant 0 : i32
    %c0_i32_1 = arith.constant 0 : i32
    return %c0_i32, %c0_i32_0 : i32, i32
  }
  func.func @transform_5(%arg0: i32, %arg1: i32) -> (i32, i32) {
    %c0_i32 = arith.constant 0 : i32
    %c0_i32_0 = arith.constant 0 : i32
    return %c0_i32, %arg1 : i32, i32
  }
  func.func @transform_6(%arg0: i32, %arg1: i32) -> (i32, i32) {
    %c0_i32 = arith.constant 0 : i32
    %c0_i32_0 = arith.constant 0 : i32
    return %c0_i32, %arg1 : i32, i32
  }
  func.func @transform_7(%arg0: i32, %arg1: i32) -> (i32, i32) {
    %c0_i32 = arith.constant 0 : i32
    return %arg0, %arg1 : i32, i32
  }
}

</mosaic_0001>

<llo_original>
// kernel: tpu_custom_call.1
$region0: #{tpu_custom_call.1}
  #allocation0 [shape = 'u32[]', space=smem, size = 0x4, offset = 0x4, fixed_abs, tag = 'smem constant byte address 0x4 - core index']
  #allocation1 [shape = 'u32[144,128]{1,0:T(1,128)}', space=vmem, size = 0x12000, scoped, tag = 'internal scratch']
  #allocation2 [shape = 'bf16[8,128]{1,0:T(8,128)(2,1)}', space=vmem, size = 0x800, scoped, tag = 'scratch operand']
  #allocation3 [shape = 'f32[1,1]{1,0:T(1,128)S(6)}', space=smem, size = 0x200, scoped, tag = 'scoped memory for tpu_custom_call.1']
  %s0 = inlined_call_operand.hbm [shape: f32[8,128], index: 0, kind: input, shape index: {}]
  %s1 = inlined_call_operand.vmem [shape: f32[1,128], index: 1, kind: input, shape index: {}]
  %s2 = inlined_call_operand.<no memory space> [shape: f32[1,1], index: 2, kind: input, shape index: {}]
  %s3 = inlined_call_operand.vmem [shape: f32[1,128], index: 3, kind: input, shape index: {}]
  %s4 = inlined_call_operand.vmem [shape: f32[1,128], index: 4, kind: input, shape index: {}]
  %s5 = inlined_call_operand.hbm [shape: bf16[128,256], index: 5, kind: input, shape index: {}]
  %s6 = inlined_call_operand.vmem [shape: f32[1,256], index: 6, kind: input, shape index: {}]
  %s7 = inlined_call_operand.hbm [shape: f32[8,256], index: 7, kind: output, shape index: {}]
  %s8 = sld [smem:[#allocation0]]
  $region73: #{tpu_custom_call.1} parent=0
    _
  %s10 = ssub.s32 1, %s8
  %s11 = scalar_select 0, %s10, %s8
  %12 = sst [smem:[#allocation3]] %s2
  $region1: #{tpu_custom_call.1} parent=0
    #allocation4 [shape = 'u8[4096]{0}', space=vmem, size = 0x1000, scoped, tag = 'input window, operand 0, single buffered']
    #allocation5 [shape = 's32[2]{0}', space=sflag, size = 0x8, scoped, tag = 'scoped memory for tpu_custom_call.1']
    #allocation6 [shape = 's32[2]{0}', space=sflag, size = 0x8, scoped, tag = 'scoped memory for tpu_custom_call.1']
    #allocation7 [shape = 'u8[65536]{0}', space=vmem, size = 0x10000, scoped, tag = 'input window, operand 5']
    #allocation8 [shape = 's32[2]{0}', space=sflag, size = 0x8, scoped, tag = 'scoped memory for tpu_custom_call.1']
    #allocation9 [shape = 'u8[8192]{0}', space=vmem, size = 0x2000, scoped, tag = 'output window, operand 0']
    %13 = vsyncpa [#allocation5], 0
    %14 = vsyncpa [#allocation8], 0
    %s15 = scalar_lea.sflag [#allocation8], 1
    %16 = vsyncpa %s15, 0
    %17 = vsyncpa [#allocation6], 0
    %s18 = scalar_lea.sflag [#allocation6], 1
    %19 = vsyncpa %s18, 0
    loop: start=0, step=1, limit=4
    $region2: #{tpu_custom_call.1} parent=1 // loop_pre_header
      _
    $region3: #{tpu_custom_call.1} parent=1 // loop_header
      %s21 = sphi 0, %s25
      %p22 = scmp.ge.s32.totalorder %s21, 4
      %s28 = sphi 0, %s40
      %s29 = sphi 0, %s36
      %s30 = sphi 0, %s28
      %s31 = sphi 0, %s29
      %s32 = sphi 0, %s30
      %s33 = sphi 0, %s31
      %s43 = sphi 0, %s45
      %s46 = sphi 0, %s43
      %s47 = sphi 0, %s46
      %s63 = sphi 0, %s47
      %s67 = sphi 0, %s67
      %s69 = sphi 0, %s67
      %s70 = sphi 0, %s69
      %s84 = sphi 0, %s70
      %s88 = sphi 0, %s88
      %s90 = sphi 0, %s88
      %s91 = sphi 0, %s90
      %s105 = sphi 0, %s91
      %s109 = sphi 0, %s109
      %s111 = sphi 0, %s109
      %s112 = sphi 0, %s111
      %s126 = sphi 0, %s112
      %s130 = sphi 0, %s130
      %s132 = sphi 0, %s130
      %s133 = sphi 0, %s132
      %s147 = sphi 0, %s133
      %s153 = sphi 0, %s155
      %s156 = sphi 0, %s153
      %s157 = sphi 0, %s156
      %s173 = sphi 0, %s157
      %s179 = sphi 0, %s181
      %s182 = sphi 0, %s179
      %s183 = sphi 0, %s182
      %s199 = sphi 0, %s183
      %s207 = sphi 0, %s209
      %s210 = sphi 0, %s207
      %s211 = sphi 0, %s210
      %s227 = sphi 0, %s211
    $region4: #{tpu_custom_call.1} parent=1 // loop_header_branch
      %24 = sbr.rel (%p22) target = $region8
    $region5: #{tpu_custom_call.1} parent=1 // loop_body
      %s26 = ssub.s32 %s21, 1
      %s27 = ssub.s32 %s21, 2
      %s34 = sadd.s32 1, %s29
      %p35 = scmp.ge.s32.totalorder %s34, 2
      %s36 = scalar_select %p35, 0, %s34
      %s37 = sadd.s32 1, %s28
      %s38 = scalar_select %p35, %s37, %s28
      %p39 = scmp.ge.s32.totalorder %s38, 1
      %s40 = scalar_select %p39, 0, %s38
      %s41 = ssub.s32 %s28, %s40
      %p42 = scmp.eq.s32.totalorder %s41, 0
      %s44 = sadd.s32 %s43, 1
      %s45 = scalar_select %p42, %s43, %s44
      %p48 = pneg %p42
      %p49 = scmp.eq.s32.totalorder %s21, 1
      %p50 = por %p48, %p49
      %p51 = scmp.ne.s32.totalorder %s43, %s46
      %p52 = scmp.eq.s32.totalorder %s21, 0
      %p53 = por %p51, %p52
      %p54 = scmp.ne.s32.totalorder %s43, %s46
      %p55 = scmp.eq.s32.totalorder %s26, 1
      %p56 = por %p54, %p55
      %p57 = scmp.ne.s32.totalorder %s46, %s47
      %p58 = scmp.eq.s32.totalorder %s26, 0
      %p59 = por %p57, %p58
      %p60 = scmp.ne.s32.totalorder %s46, %s47
      %p61 = scmp.eq.s32.totalorder %s27, 1
      %p62 = por %p60, %p61
      %p64 = scmp.ne.s32.totalorder %s47, %s63
      %p65 = scmp.eq.s32.totalorder %s27, 0
      %p66 = por %p64, %p65
      %s68 = sadd.s32 %s67, 1
      %p71 = scmp.eq.s32.totalorder %s21, 1
      %p72 = scmp.ne.s32.totalorder %s67, %s69
      %p73 = scmp.eq.s32.totalorder %s21, 0
      %p74 = por %p72, %p73
      %p75 = scmp.ne.s32.totalorder %s67, %s69
      %p76 = scmp.eq.s32.totalorder %s26, 1
      %p77 = por %p75, %p76
      %p78 = scmp.ne.s32.totalorder %s69, %s70
      %p79 = scmp.eq.s32.totalorder %s26, 0
      %p80 = por %p78, %p79
      %p81 = scmp.ne.s32.totalorder %s69, %s70
      %p82 = scmp.eq.s32.totalorder %s27, 1
      %p83 = por %p81, %p82
      %p85 = scmp.ne.s32.totalorder %s70, %s84
      %p86 = scmp.eq.s32.totalorder %s27, 0
      %p87 = por %p85, %p86
      %s89 = sadd.s32 %s88, 1
      %p92 = scmp.eq.s32.totalorder %s21, 1
      %p93 = scmp.ne.s32.totalorder %s88, %s90
      %p94 = scmp.eq.s32.totalorder %s21, 0
      %p95 = por %p93, %p94
      %p96 = scmp.ne.s32.totalorder %s88, %s90
      %p97 = scmp.eq.s32.totalorder %s26, 1
      %p98 = por %p96, %p97
      %p99 = scmp.ne.s32.totalorder %s90, %s91
      %p100 = scmp.eq.s32.totalorder %s26, 0
      %p101 = por %p99, %p100
      %p102 = scmp.ne.s32.totalorder %s90, %s91
      %p103 = scmp.eq.s32.totalorder %s27, 1
      %p104 = por %p102, %p103
      %p106 = scmp.ne.s32.totalorder %s91, %s105
      %p107 = scmp.eq.s32.totalorder %s27, 0
      %p108 = por %p106, %p107
      %s110 = sadd.s32 %s109, 1
      %p113 = scmp.eq.s32.totalorder %s21, 1
      %p114 = scmp.ne.s32.totalorder %s109, %s111
      %p115 = scmp.eq.s32.totalorder %s21, 0
      %p116 = por %p114, %p115
      %p117 = scmp.ne.s32.totalorder %s109, %s111
      %p118 = scmp.eq.s32.totalorder %s26, 1
      %p119 = por %p117, %p118
      %p120 = scmp.ne.s32.totalorder %s111, %s112
      %p121 = scmp.eq.s32.totalorder %s26, 0
      %p122 = por %p120, %p121
      %p123 = scmp.ne.s32.totalorder %s111, %s112
      %p124 = scmp.eq.s32.totalorder %s27, 1
      %p125 = por %p123, %p124
      %p127 = scmp.ne.s32.totalorder %s112, %s126
      %p128 = scmp.eq.s32.totalorder %s27, 0
      %p129 = por %p127, %p128
      %s131 = sadd.s32 %s130, 1
      %p134 = scmp.eq.s32.totalorder %s21, 1
      %p135 = scmp.ne.s32.totalorder %s130, %s132
      %p136 = scmp.eq.s32.totalorder %s21, 0
      %p137 = por %p135, %p136
      %p138 = scmp.ne.s32.totalorder %s130, %s132
      %p139 = scmp.eq.s32.totalorder %s26, 1
      %p140 = por %p138, %p139
      %p141 = scmp.ne.s32.totalorder %s132, %s133
      %p142 = scmp.eq.s32.totalorder %s26, 0
      %p143 = por %p141, %p142
      %p144 = scmp.ne.s32.totalorder %s132, %s133
      %p145 = scmp.eq.s32.totalorder %s27, 1
      %p146 = por %p144, %p145
      %p148 = scmp.ne.s32.totalorder %s133, %s147
      %p149 = scmp.eq.s32.totalorder %s27, 0
      %p150 = por %p148, %p149
      %s151 = ssub.s32 %s29, %s36
      %p152 = scmp.eq.s32.totalorder %s151, 0
      %s154 = sadd.s32 %s153, 1
      %s155 = scalar_select %p152, %s153, %s154
      %p158 = pneg %p152
      %p159 = scmp.eq.s32.totalorder %s21, 1
      %p160 = por %p158, %p159
      %p161 = scmp.ne.s32.totalorder %s153, %s156
      %p162 = scmp.eq.s32.totalorder %s21, 0
      %p163 = por %p161, %p162
      %p164 = scmp.ne.s32.totalorder %s153, %s156
      %p165 = scmp.eq.s32.totalorder %s26, 1
      %p166 = por %p164, %p165
      %p167 = scmp.ne.s32.totalorder %s156, %s157
      %p168 = scmp.eq.s32.totalorder %s26, 0
      %p169 = por %p167, %p168
      %p170 = scmp.ne.s32.totalorder %s156, %s157
      %p171 = scmp.eq.s32.totalorder %s27, 1
      %p172 = por %p170, %p171
      %p174 = scmp.ne.s32.totalorder %s157, %s173
      %p175 = scmp.eq.s32.totalorder %s27, 0
      %p176 = por %p174, %p175
      %s177 = ssub.s32 %s29, %s36
      %p178 = scmp.eq.s32.totalorder %s177, 0
      %s180 = sadd.s32 %s179, 1
      %s181 = scalar_select %p178, %s179, %s180
      %p184 = pneg %p178
      %p185 = scmp.eq.s32.totalorder %s21, 1
      %p186 = por %p184, %p185
      %p187 = scmp.ne.s32.totalorder %s179, %s182
      %p188 = scmp.eq.s32.totalorder %s21, 0
      %p189 = por %p187, %p188
      %p190 = scmp.ne.s32.totalorder %s179, %s182
      %p191 = scmp.eq.s32.totalorder %s26, 1
      %p192 = por %p190, %p191
      %p193 = scmp.ne.s32.totalorder %s182, %s183
      %p194 = scmp.eq.s32.totalorder %s26, 0
      %p195 = por %p193, %p194
      %p196 = scmp.ne.s32.totalorder %s182, %s183
      %p197 = scmp.eq.s32.totalorder %s27, 1
      %p198 = por %p196, %p197
      %p200 = scmp.ne.s32.totalorder %s183, %s199
      %p201 = scmp.eq.s32.totalorder %s27, 0
      %p202 = por %p200, %p201
      %s203 = ssub.s32 %s28, %s40
      %s204 = ssub.s32 %s29, %s36
      %s205 = sor.u32 %s203, %s204
      %p206 = scmp.eq.s32.totalorder %s205, 0
      %s208 = sadd.s32 %s207, 1
      %s209 = scalar_select %p206, %s207, %s208
      %p212 = pneg %p206
      %p213 = scmp.eq.s32.totalorder %s21, 1
      %p214 = por %p212, %p213
      %p215 = scmp.ne.s32.totalorder %s207, %s210
      %p216 = scmp.eq.s32.totalorder %s21, 0
      %p217 = por %p215, %p216
      %p218 = scmp.ne.s32.totalorder %s207, %s210
      %p219 = scmp.eq.s32.totalorder %s26, 1
      %p220 = por %p218, %p219
      %p221 = scmp.ne.s32.totalorder %s210, %s211
      %p222 = scmp.eq.s32.totalorder %s26, 0
      %p223 = por %p221, %p222
      %p224 = scmp.ne.s32.totalorder %s210, %s211
      %p225 = scmp.eq.s32.totalorder %s27, 1
      %p226 = por %p224, %p225
      %p228 = scmp.ne.s32.totalorder %s211, %s227
      %p229 = scmp.eq.s32.totalorder %s27, 0
      %p230 = por %p228, %p229
      %p231 = scmp.le.s32.totalorder 1, %s21
      %p232 = scmp.lt.s32.totalorder %s21, 3
      %p233 = pnand %p231, %p232
      %p234 = pneg %p233
      // Predicated region
      $region9: #{tpu_custom_call.1} parent=5 // pred_check
        _
      $region10: #{tpu_custom_call.1} parent=5 // pred_check_branch
        %236 = sbr.rel (%p233) target = $region12
      $region11: #{tpu_custom_call.1} parent=5 // pred_region
        %s237 = ssub.s32 %s21, 1
        // Predicated region
        $region13: #{tpu_custom_call.1} parent=11 // pred_check
          %p238 = pneg %p59
        $region14: #{tpu_custom_call.1} parent=11 // pred_check_branch
          %240 = sbr.rel (%p238) target = $region16
        $region15: #{tpu_custom_call.1} parent=11 // pred_region
          %s242 = ssub.s32 128, 128
          %243 = vsyncadd [#allocation5], %s242
          %s244 = smul.addr %s30, 128
          %s245 = scalar_lea.hbm %s0, %s244
          %s247 = sshll.u32 [#allocation4], 4
          %s248 = int_to_ptr.vmem [resolvable:$true] %s247
          %250 = dma.hbm_to_vmem [thread:$0]  %s245, 128, %s248, [#allocation5]
        $region16: #{tpu_custom_call.1} parent=11 // pred_fallthru
          _
        // Predicated region
        $region17: #{tpu_custom_call.1} parent=11 // pred_check
          %p251 = pneg %p80
        $region18: #{tpu_custom_call.1} parent=11 // pred_check_branch
          %253 = sbr.rel (%p251) target = $region20
        $region19: #{tpu_custom_call.1} parent=11 // pred_region
          _
        $region20: #{tpu_custom_call.1} parent=11 // pred_fallthru
          _
        // Predicated region
        $region21: #{tpu_custom_call.1} parent=11 // pred_check
          %p254 = pneg %p101
        $region22: #{tpu_custom_call.1} parent=11 // pred_check_branch
          %256 = sbr.rel (%p254) target = $region24
        $region23: #{tpu_custom_call.1} parent=11 // pred_region
          _
        $region24: #{tpu_custom_call.1} parent=11 // pred_fallthru
          _
        // Predicated region
        $region25: #{tpu_custom_call.1} parent=11 // pred_check
          %p257 = pneg %p122
        $region26: #{tpu_custom_call.1} parent=11 // pred_check_branch
          %259 = sbr.rel (%p257) target = $region28
        $region27: #{tpu_custom_call.1} parent=11 // pred_region
          _
        $region28: #{tpu_custom_call.1} parent=11 // pred_fallthru
          _
        // Predicated region
        $region29: #{tpu_custom_call.1} parent=11 // pred_check
          %p260 = pneg %p143
        $region30: #{tpu_custom_call.1} parent=11 // pred_check_branch
          %262 = sbr.rel (%p260) target = $region32
        $region31: #{tpu_custom_call.1} parent=11 // pred_region
          _
        $region32: #{tpu_custom_call.1} parent=11 // pred_fallthru
          _
      $region12: #{tpu_custom_call.1} parent=5 // pred_fallthru
        _
      %p263 = scmp.lt.s32.totalorder %s21, 2
      // Predicated region
      $region33: #{tpu_custom_call.1} parent=5 // pred_check
        %p264 = pneg %p263
      $region34: #{tpu_custom_call.1} parent=5 // pred_check_branch
        %266 = sbr.rel (%p264) target = $region36
      $region35: #{tpu_custom_call.1} parent=5 // pred_region
        // Predicated region
        $region37: #{tpu_custom_call.1} parent=35 // pred_check
          %p267 = pneg %p163
        $region38: #{tpu_custom_call.1} parent=35 // pred_check_branch
          %269 = sbr.rel (%p267) target = $region40
        $region39: #{tpu_custom_call.1} parent=35 // pred_region
          %s270 = sand.u32 %s153, 1
          %s271 = scalar_lea.sflag [#allocation8], %s270
          %s272 = sand.u32 %s153, 1
          %s273 = smul.addr %s272, 64
          %s274 = scalar_lea.vmem [#allocation7], %s273
          %s276 = ssub.s32 1024, 1024
          %277 = vsyncadd %s271, %s276
          %s278 = smul.addr %s29, 64
          %s279 = scalar_lea.hbm %s5, %s278
          %s280 = sshll.u32 %s274, 4
          %s281 = int_to_ptr.vmem [resolvable:$true] %s280
          %286 = dma.hbm_to_vmem [thread:$0]  %s279, 1024, %s281, %s271, 128, 64, 4
        $region40: #{tpu_custom_call.1} parent=35 // pred_fallthru
          _
        // Predicated region
        $region41: #{tpu_custom_call.1} parent=35 // pred_check
          %p287 = pneg %p189
        $region42: #{tpu_custom_call.1} parent=35 // pred_check_branch
          %289 = sbr.rel (%p287) target = $region44
        $region43: #{tpu_custom_call.1} parent=35 // pred_region
          %p290 = scmp.lt.s32.totalorder %s29, 1
          %s291 = scalar_select %p290, %s29, 1
          %s292 = scalar_lea.vmem %s6, %s291
        $region44: #{tpu_custom_call.1} parent=35 // pred_fallthru
          _
      $region36: #{tpu_custom_call.1} parent=5 // pred_fallthru
        _
      %p293 = scmp.le.s32.totalorder 1, %s21
      %p294 = scmp.lt.s32.totalorder %s21, 3
      %p295 = pnand %p293, %p294
      %p296 = pneg %p295
      // Predicated region
      $region45: #{tpu_custom_call.1} parent=5 // pred_check
        _
      $region46: #{tpu_custom_call.1} parent=5 // pred_check_branch
        %298 = sbr.rel (%p295) target = $region48
      $region47: #{tpu_custom_call.1} parent=5 // pred_region
        %s299 = ssub.s32 %s21, 1
        // Predicated region
        $region49: #{tpu_custom_call.1} parent=47 // pred_check
          %p300 = pneg %p59
        $region50: #{tpu_custom_call.1} parent=47 // pred_check_branch
          %302 = sbr.rel (%p300) target = $region52
        $region51: #{tpu_custom_call.1} parent=47 // pred_region
          %303 = dma.done [#allocation5], 128
        $region52: #{tpu_custom_call.1} parent=47 // pred_fallthru
          _
        %s304 = sand.u32 %s156, 1
        %s305 = scalar_lea.sflag [#allocation8], %s304
        %s306 = sand.u32 %s156, 1
        %s307 = smul.addr %s306, 64
        %s308 = scalar_lea.vmem [#allocation7], %s307
        // Predicated region
        $region53: #{tpu_custom_call.1} parent=47 // pred_check
          %p309 = pneg %p169
        $region54: #{tpu_custom_call.1} parent=47 // pred_check_branch
          %311 = sbr.rel (%p309) target = $region56
        $region55: #{tpu_custom_call.1} parent=47 // pred_region
          %312 = dma.done %s305, 1024
        $region56: #{tpu_custom_call.1} parent=47 // pred_fallthru
          _
        %p313 = pneg %p59
        %p314 = pneg %p56
        %p315 = pneg %p80
        %p316 = pneg %p77
        %p317 = pneg %p101
        %p318 = pneg %p98
        %p319 = pneg %p122
        %p320 = pneg %p119
        %p321 = pneg %p143
        %p322 = pneg %p140
        %s323 = sand.u32 %s156, 1
        %s324 = scalar_lea.sflag [#allocation8], %s323
        %s325 = sand.u32 %s156, 1
        %s326 = smul.addr %s325, 64
        %s327 = scalar_lea.vmem [#allocation7], %s326
        %p328 = pneg %p169
        %p329 = pneg %p166
        %p330 = scmp.lt.s32.totalorder %s31, 1
        %s331 = scalar_select %p330, %s31, 1
        %s332 = scalar_lea.vmem %s6, %s331
        %p333 = pneg %p195
        %p334 = pneg %p192
        %p335 = pneg %p223
        %p336 = pneg %p220
        %s337 = sand.u32 %s210, 1
        %s338 = scalar_lea.sflag [#allocation6], %s337
        %s339 = sand.u32 %s210, 1
        %s340 = smul.addr %s339, 8
        %s341 = scalar_lea.vmem [#allocation9], %s340
        %p342 = scmp.lt.s32.totalorder %s31, 1
        %s343 = scalar_select %p342, %s31, 1
        %s344 = scalar_lea.vmem %s6, %s343
        %p346 = scmp.eq.s32.totalorder %s31, 0
        // Predicated region
        $region57: #{tpu_custom_call.1} parent=47 // pred_check
          %p347 = pneg %p346
        $region58: #{tpu_custom_call.1} parent=47 // pred_check_branch
          %349 = sbr.rel (%p347) target = $region60
        $region59: #{tpu_custom_call.1} parent=47 // pred_region
          %v350 = vld [vmem:[#allocation4] sm:$0xff]
          %v351 = vld [vmem:[%s1] sm:$0x1]
          %v353 = vlaneseq
          %v354 = vshrl.u32 %v353, 7
          %v355 = vsub.s32 0, %v354
          %v356 = vrot.slane %v351, %v355
          %v358 = vmul.f32 %v350, %v356
          %359 = vadd.xlane.f32.xlu0 %v358
          %v360 = vpop.xlane.xlu0 %359
          %s361 = sld [smem:[#allocation3]]
          %v362 = vstv %s361
          %v363 = vadd.f32 %v360, %v362
          %v364 = vxor.u32 %v363, 2147483648
          %v365 = vmul.f32 %v364, 1.442695
          %v366 = vpow.pop %v365
          %v367 = vadd.f32 %v366, 1.0
          %v368 = vrcp.pop %v367
          %v369 = vmul.f32 1.0, %v368
          %v370 = vld [vmem:[%s3] sm:$0x1]
          %v372 = vlaneseq
          %v373 = vshrl.u32 %v372, 7
          %v374 = vsub.s32 0, %v373
          %v375 = vrot.slane %v370, %v374
          %v377 = vmul.f32 %v369, %v375
          %v378 = vld [vmem:[%s4] sm:$0x1]
          %v380 = vlaneseq
          %v381 = vshrl.u32 %v380, 7
          %v382 = vsub.s32 0, %v381
          %v383 = vrot.slane %v378, %v382
          %v385 = vadd.f32 %v377, %v383
          %v386 = vmax.f32 %v385, 0.0
          %v387 = vpack.c.bf16 %v386, %v386
          %388 = vst [vmem:[#allocation2] sm:$0xf] %v387
        $region60: #{tpu_custom_call.1} parent=47 // pred_fallthru
          _
        %v389 = vld [vmem:[#allocation2] sm:$0xf]
        %v390 = vld [vmem:[%s308] sm:$0xf]
        %v391 = vld [vmem:[%s308 + $0x4] sm:$0xf]
        %v392 = vld [vmem:[%s308 + $0x8] sm:$0xf]
        %v393 = vld [vmem:[%s308 + $0xc] sm:$0xf]
        %v394 = vld [vmem:[%s308 + $0x10] sm:$0xf]
        %v395 = vld [vmem:[%s308 + $0x14] sm:$0xf]
        %v396 = vld [vmem:[%s308 + $0x18] sm:$0xf]
        %v397 = vld [vmem:[%s308 + $0x1c] sm:$0xf]
        %v398 = vld [vmem:[%s308 + $0x20] sm:$0xf]
        %v399 = vld [vmem:[%s308 + $0x24] sm:$0xf]
        %v400 = vld [vmem:[%s308 + $0x28] sm:$0xf]
        %v401 = vld [vmem:[%s308 + $0x2c] sm:$0xf]
        %v402 = vld [vmem:[%s308 + $0x30] sm:$0xf]
        %v403 = vld [vmem:[%s308 + $0x34] sm:$0xf]
        %v404 = vld [vmem:[%s308 + $0x38] sm:$0xf]
        %v405 = vld [vmem:[%s308 + $0x3c] sm:$0xf]
        %v406 = vld [vmem:[%s344] sm:$0x1]
        %v408 = vlaneseq
        %v409 = vshrl.u32 %v408, 7
        %v410 = vsub.s32 0, %v409
        %v411 = vrot.slane %v406, %v410
        %v429 = vunpack.c.l.b16 %v390
        %v430 = vunpack.c.l.b16 %v391
        %v431 = vunpack.c.l.b16 %v392
        %v432 = vunpack.c.l.b16 %v393
        %v433 = vunpack.c.l.b16 %v394
        %v434 = vunpack.c.l.b16 %v395
        %v435 = vunpack.c.l.b16 %v396
        %v436 = vunpack.c.l.b16 %v397
        %v437 = vunpack.c.l.b16 %v398
        %v438 = vunpack.c.l.b16 %v399
        %v439 = vunpack.c.l.b16 %v400
        %v440 = vunpack.c.l.b16 %v401
        %v441 = vunpack.c.l.b16 %v402
        %v442 = vunpack.c.l.b16 %v403
        %v443 = vunpack.c.l.b16 %v404
        %v444 = vunpack.c.l.b16 %v405
        %v445 = vpack.c.b16 %v430, %v429
        %v446 = vpack.c.b16 %v432, %v431
        %v447 = vpack.c.b16 %v434, %v433
        %v448 = vpack.c.b16 %v436, %v435
        %v449 = vpack.c.b16 %v438, %v437
        %v450 = vpack.c.b16 %v440, %v439
        %v451 = vpack.c.b16 %v442, %v441
        %v452 = vpack.c.b16 %v444, %v443
        %461 = vmatprep.subr.bf16.mxu0 0
        %462 = vmatpush1.bf16.msra.mxu0 %v445
        %463 = vmatprep.subr.bf16.mxu0 0
        %464 = vmatpush1.bf16.msra.mxu0 %v446
        %465 = vmatprep.subr.bf16.mxu0 0
        %466 = vmatpush1.bf16.msra.mxu0 %v447
        %467 = vmatprep.subr.bf16.mxu0 0
        %468 = vmatpush1.bf16.msra.mxu0 %v448
        %469 = vmatprep.subr.bf16.mxu0 0
        %470 = vmatpush1.bf16.msra.mxu0 %v449
        %471 = vmatprep.subr.bf16.mxu0 0
        %472 = vmatpush1.bf16.msra.mxu0 %v450
        %473 = vmatprep.subr.bf16.mxu0 0
        %474 = vmatpush1.bf16.msra.mxu0 %v451
        %475 = vmatprep.subr.bf16.mxu0 0
        %476 = vmatpush1.bf16.msra.mxu0 %v452
        %477 = vmatprep.subr.bf16.mxu0 0
        %478 = vmatpush1.bf16.msra.mxu0 0
        %479 = vmatprep.subr.bf16.mxu0 0
        %480 = vmatpush1.bf16.msra.mxu0 0
        %481 = vmatprep.subr.bf16.mxu0 0
        %482 = vmatpush1.bf16.msra.mxu0 0
        %483 = vmatprep.subr.bf16.mxu0 0
        %484 = vmatpush1.bf16.msra.mxu0 0
        %485 = vmatprep.subr.bf16.mxu0 0
        %486 = vmatpush1.bf16.msra.mxu0 0
        %487 = vmatprep.subr.bf16.mxu0 0
        %488 = vmatpush1.bf16.msra.mxu0 0
        %489 = vmatprep.subr.bf16.mxu0 0
        %490 = vmatpush1.bf16.msra.mxu0 0
        %491 = vmatprep.subr.bf16.mxu0 0
        %492 = vmatpush1.bf16.msra.mxu0 0
        %493 = vmatprep.mubr.bf16.mxu0 0
        %494 = vmatmul.mubr.bf16.gmra.mrb[0].mxu0 %v389
        %v495 = vpop.f32.mrb[0].mxu0
        %v496 = vadd.f32 %v411, %v495
        %v497 = vpop.f32.mrb[0].mxu0
        %v498 = vpop.f32.mrb[0].mxu0
        %v499 = vpop.f32.mrb[0].mxu0
        %500 = vdwg.mxu0
        %501 = vst [vmem:[%s341] sm:$0xff] %v496
        %s502 = sand.u32 %s210, 1
        %s503 = scalar_lea.sflag [#allocation6], %s502
        %s504 = sand.u32 %s210, 1
        %s505 = smul.addr %s504, 8
        %s506 = scalar_lea.vmem [#allocation9], %s505
        // Predicated region
        $region61: #{tpu_custom_call.1} parent=47 // pred_check
          %p507 = pneg %p220
        $region62: #{tpu_custom_call.1} parent=47 // pred_check_branch
          %509 = sbr.rel (%p507) target = $region64
        $region63: #{tpu_custom_call.1} parent=47 // pred_region
          %s511 = ssub.s32 128, 128
          %512 = vsyncadd %s503, %s511
          %s513 = smul.addr %s30, 2
          %s514 = sadd.s32 %s31, %s513
          %s515 = smul.addr %s514, 128
          %s516 = scalar_lea.hbm %s7, %s515
          %s518 = sshll.u32 %s506, 4
          %s519 = int_to_ptr.vmem [resolvable:$true] %s518
          %521 = dma.vmem_to_hbm [thread:$0]  %s519, 128, %s516, %s503
        $region64: #{tpu_custom_call.1} parent=47 // pred_fallthru
          _
      $region48: #{tpu_custom_call.1} parent=5 // pred_fallthru
        _
      %p522 = scmp.le.s32.totalorder 2, %s21
      // Predicated region
      $region65: #{tpu_custom_call.1} parent=5 // pred_check
        %p523 = pneg %p522
      $region66: #{tpu_custom_call.1} parent=5 // pred_check_branch
        %525 = sbr.rel (%p523) target = $region68
      $region67: #{tpu_custom_call.1} parent=5 // pred_region
        %s526 = ssub.s32 %s21, 2
        // Predicated region
        $region69: #{tpu_custom_call.1} parent=67 // pred_check
          %p527 = pneg %p226
        $region70: #{tpu_custom_call.1} parent=67 // pred_check_branch
          %529 = sbr.rel (%p527) target = $region72
        $region71: #{tpu_custom_call.1} parent=67 // pred_region
          %s530 = sand.u32 %s211, 1
          %s531 = scalar_lea.sflag [#allocation6], %s530
          %s532 = sand.u32 %s211, 1
          %s533 = smul.addr %s532, 8
          %s534 = scalar_lea.vmem [#allocation9], %s533
          %535 = dma.done %s531, 128
        $region72: #{tpu_custom_call.1} parent=67 // pred_fallthru
          _
      $region68: #{tpu_custom_call.1} parent=5 // pred_fallthru
        _
    $region6: #{tpu_custom_call.1} parent=1 // loop_footer
      %s25 = sadd.s32 1, %s21
    $region7: #{tpu_custom_call.1} parent=1 // loop_footer_branch
      %20 = sbr.rel target = $region3
    $region8: #{tpu_custom_call.1} parent=1 // loop_exit
      _
    %536 = vsyncpa [#allocation5], 1
    %s537 = scalar_lea.sflag [#allocation5], 1
    %538 = vsyncpa %s537, 1
    %539 = vsyncpa [#allocation8], 1
    %s540 = scalar_lea.sflag [#allocation8], 1
    %541 = vsyncpa %s540, 1
    %542 = vsyncpa [#allocation6], 1
    %s543 = scalar_lea.sflag [#allocation6], 1
    %544 = vsyncpa %s543, 1

</llo_original>
